<compile_context>
chip_gen: v7x
topology: tpu7x:2x2x1
jax: 0.10.0
libtpu: 0.0.40
codegen_flags: <defaults>
</compile_context>

<pallas_src>
import functools
import math

import jax
import jax.numpy as jnp
from jax.experimental import pallas as pl
from jax.experimental.pallas import tpu as pltpu

MATMUL_DTYPE = jnp.bfloat16   # bf16 MXU path (v6e/v7x); set jnp.float32 for exact f32 parity
ROW_TILE_CAP = 128            # v7x-safe (64 MiB VMEM/TC); sweep {256, 512} on v6e
_LN_EPS = 1e-5
_MASK_NEG = -1e30


def _nbytes(shape, dtype):
    n = 1
    for s in shape:
        n *= int(s)
    return n * jnp.dtype(dtype).itemsize


def _pick_tile(m, cap=ROW_TILE_CAP):
    """Largest multiple-of-8 row tile <= cap dividing m with >= 2 grid steps."""
    for t in (512, 256, 128, 64, 32, 16, 8):
        if t <= cap and t < m and m % t == 0:
            return t
    return m


def _mosaic_params(semantics, est_vmem_bytes):
    """Explicit scoped-VMEM request (defaults: 16 MiB v5e / 32 MiB v6e, v7x).

    Raised to cover the estimated working set, capped below v7x's 64 MiB/TC
    physical VMEM (the smallest across generations).
    """
    limit = int(min(max(est_vmem_bytes + (8 << 20), 32 << 20), 56 << 20))
    return pltpu.CompilerParams(dimension_semantics=semantics,
                                vmem_limit_bytes=limit)


def _layernorm(z, gamma, beta):
    mu = jnp.mean(z, axis=-1, keepdims=True)
    var = jnp.mean(jnp.square(z - mu), axis=-1, keepdims=True)
    return (z - mu) * jax.lax.rsqrt(var + _LN_EPS) * gamma + beta


# --------------------- kernel 0: hoisted K/V projection ----------------------

def _kv_proj_kernel(k_ref, wkv_ref, bkv_ref, kv_ref):
    kv = jnp.dot(k_ref[...].astype(MATMUL_DTYPE), wkv_ref[...],
                 preferred_element_type=jnp.float32) + bkv_ref[...]
    kv_ref[0] = kv.astype(kv_ref.dtype)


def _kv_projection(K2, WkvT, bkv, *, N, E):
    S = K2.shape[0]
    est = (2 * (_nbytes((S, E), K2.dtype)
                + _nbytes((1, S, 2 * E), MATMUL_DTYPE)
                + _nbytes((E, 2 * E), MATMUL_DTYPE))
           + _nbytes((1, 2 * E), jnp.float32)
           + _nbytes((S, 2 * E), jnp.float32))
    return pl.pallas_call(
        _kv_proj_kernel,
        out_shape=jax.ShapeDtypeStruct((N, S, 2 * E), MATMUL_DTYPE),
        grid=(N,),
        in_specs=[
            pl.BlockSpec((S, E), lambda n: (0, n)),        # K slab of batch n
            pl.BlockSpec((E, 2 * E), lambda n: (0, 0)),    # [Wk^T | Wv^T]
            pl.BlockSpec((1, 2 * E), lambda n: (0, 0)),    # [bk | bv]
        ],
        out_specs=pl.BlockSpec((1, S, 2 * E), lambda n: (n, 0, 0)),
        compiler_params=_mosaic_params(("parallel",), est),
    )(K2, WkvT, bkv)


# --------------------- kernel 1: fused attention block -----------------------

def _attn_block_kernel(H, E, q_ref, kv_ref, m_ref, wq_ref, bq_ref,
                       wo_ref, bo_ref, g1_ref, be1_ref, src_ref, attn_ref):
    d = E // H
    tL = q_ref.shape[0]
    S = kv_ref.shape[1]

    x = q_ref[...]                                     # (tL, E) f32 residual input
    kv = kv_ref[0]                                     # (S, 2E) projected K | V
    # Additive key_padding_mask bias built in-kernel, kept in f32.
    bias = jnp.where(m_ref[...] != 0, _MASK_NEG, 0.0).reshape(1, S)

    # Q projection for this tile; 1/sqrt(d) is folded into wq/bq in the wrapper.
    q = jnp.dot(x.astype(MATMUL_DTYPE), wq_ref[...],
                preferred_element_type=jnp.float32) + bq_ref[...]

    nt = (((1,), (1,)), ((), ()))                      # A @ B^T (contract minor dims)
    attn_acc = jnp.zeros((tL, S), jnp.float32)
    out_acc = jnp.zeros((tL, E), jnp.float32)
    for h in range(H):                                 # static unroll over heads
        lo = h * d
        qh = q[:, lo:lo + d].astype(MATMUL_DTYPE)
        kh = kv[:, lo:lo + d]
        vh = kv[:, E + lo:E + lo + d]

        # TODO(synk): if the Mosaic dump shows an XLU transpose for this A@B^T,
        # store the K projection pre-transposed (d-major) in kernel 0 instead.
        s = jax.lax.dot_general(qh, kh, nt, preferred_element_type=jnp.float32)
        s = s + bias
        mmax = jnp.max(s, axis=-1, keepdims=True)
        e = jnp.exp(s - mmax)
        denom = jnp.sum(e, axis=-1, keepdims=True)
        # Exact reciprocal so the returned attention weights match PyTorch;
        # pl.reciprocal(denom, approx=True) is cheaper if parity is not needed.
        p = e * (1.0 / denom)

        attn_acc = attn_acc + p
        ctx = jnp.dot(p.astype(MATMUL_DTYPE), vh, preferred_element_type=jnp.float32)
        # Per-head accumulated out-projection: no lane-concatenate of ctx heads.
        out_acc = out_acc + jnp.dot(ctx.astype(MATMUL_DTYPE), wo_ref[lo:lo + d, :],
                                    preferred_element_type=jnp.float32)

    attn_ref[0] = attn_acc * (1.0 / H)                 # head-averaged weights
    src_ref[...] = _layernorm(x + (out_acc + bo_ref[...]), g1_ref[...], be1_ref[...])


def _attention_block(Q2, kv, mask3, WqT, bq, WoT, bo, g1, be1, *, N, E, H):
    L = Q2.shape[0]
    S = kv.shape[1]
    tL = _pick_tile(L)
    est = (2 * (2 * _nbytes((tL, E), jnp.float32)          # Q tile + src tile
                + _nbytes((1, S, 2 * E), kv.dtype)         # resident K|V slab of batch n
                + _nbytes((1, tL, S), jnp.float32))        # attn-weights tile
           + 4 * _nbytes((E, E), MATMUL_DTYPE)             # Wq^T, Wo^T (double-buffered)
           + _nbytes((tL, 4 * E + 3 * S), jnp.float32))    # in-kernel temporaries
    kernel = functools.partial(_attn_block_kernel, H, E)
    # NOTE: the attn output tile has S (< 128 here) in the lane dim -> masked
    # partial stores; pad S / reorder if this writeback shows up at real sizes.
    return pl.pallas_call(
        kernel,
        out_shape=(jax.ShapeDtypeStruct((L, N * E), jnp.float32),   # src after LN1
                   jax.ShapeDtypeStruct((N, L, S), jnp.float32)),   # avg attn weights
        grid=(N, L // tL),
        in_specs=[
            pl.BlockSpec((tL, E), lambda n, i: (i, n)),           # Q tile of batch n
            pl.BlockSpec((1, S, 2 * E), lambda n, i: (n, 0, 0)),  # projected K|V, batch n
            pl.BlockSpec((1, 1, S), lambda n, i: (n, 0, 0)),      # key_padding_mask row n
            pl.BlockSpec((E, E), lambda n, i: (0, 0)),            # Wq^T (scale folded)
            pl.BlockSpec((1, E), lambda n, i: (0, 0)),            # bq * scale
            pl.BlockSpec((E, E), lambda n, i: (0, 0)),            # Wo^T
            pl.BlockSpec((1, E), lambda n, i: (0, 0)),            # bo
            pl.BlockSpec((1, E), lambda n, i: (0, 0)),            # norm1 gamma
            pl.BlockSpec((1, E), lambda n, i: (0, 0)),            # norm1 beta
        ],
        out_specs=(pl.BlockSpec((tL, E), lambda n, i: (i, n)),
                   pl.BlockSpec((1, tL, S), lambda n, i: (n, i, 0))),
        compiler_params=_mosaic_params(("parallel", "parallel"), est),
    )(Q2, kv, mask3, WqT, bq, WoT, bo, g1, be1)


# ------------------------- kernel 2: fused FFN block --------------------------

def _ffn_block_kernel(x_ref, w1_ref, b1_ref, w2_ref, b2_ref, g2_ref, be2_ref, o_ref):
    x = x_ref[...]                                     # (tm, E) f32
    h = jnp.dot(x.astype(MATMUL_DTYPE), w1_ref[...],
                preferred_element_type=jnp.float32) + b1_ref[...]
    h = jnp.maximum(h, 0.0)
    y = jnp.dot(h.astype(MATMUL_DTYPE), w2_ref[...],
                preferred_element_type=jnp.float32) + b2_ref[...]
    o_ref[...] = _layernorm(x + y, g2_ref[...], be2_ref[...])


def _ffn_block(x, W1T, b1, W2T, b2, g2, be2):
    M, E = x.shape
    FF = W1T.shape[1]
    tm = _pick_tile(M)
    est = (4 * _nbytes((tm, E), jnp.float32)                     # x + out tiles (2x buf)
           + 2 * (_nbytes((E, FF), MATMUL_DTYPE) + _nbytes((FF, E), MATMUL_DTYPE))
           + _nbytes((tm, FF + 2 * E), jnp.float32))             # temporaries
    return pl.pallas_call(
        _ffn_block_kernel,
        out_shape=jax.ShapeDtypeStruct((M, E), jnp.float32),
        grid=(M // tm,),
        in_specs=[
            pl.BlockSpec((tm, E), lambda i: (i, 0)),
            pl.BlockSpec((E, FF), lambda i: (0, 0)),
            pl.BlockSpec((1, FF), lambda i: (0, 0)),
            pl.BlockSpec((FF, E), lambda i: (0, 0)),
            pl.BlockSpec((1, E), lambda i: (0, 0)),
            pl.BlockSpec((1, E), lambda i: (0, 0)),
            pl.BlockSpec((1, E), lambda i: (0, 0)),
        ],
        out_specs=pl.BlockSpec((tm, E), lambda i: (i, 0)),
        compiler_params=_mosaic_params(("parallel",), est),
    )(x, W1T, b1, W2T, b2, g2, be2)


# ------------------------------- parameters -----------------------------------

def init_params(key, input_dim, nhead, dim_feedforward):
    E = input_dim
    ks = jax.random.split(key, 8)

    def u(k, shape, fan_in):
        bound = 1.0 / math.sqrt(fan_in)
        return jax.random.uniform(k, shape, jnp.float32, -bound, bound)

    return dict(
        nhead=nhead,
        in_proj_w=u(ks[0], (3 * E, E), E),
        in_proj_b=u(ks[1], (3 * E,), E),
        out_proj_w=u(ks[2], (E, E), E),
        out_proj_b=u(ks[3], (E,), E),
        lin1_w=u(ks[4], (dim_feedforward, E), E),
        lin1_b=u(ks[5], (dim_feedforward,), E),
        lin2_w=u(ks[6], (E, dim_feedforward), dim_feedforward),
        lin2_b=u(ks[7], (E,), dim_feedforward),
        norm1_g=jnp.ones((E,), jnp.float32),
        norm1_b=jnp.zeros((E,), jnp.float32),
        norm2_g=jnp.ones((E,), jnp.float32),
        norm2_b=jnp.zeros((E,), jnp.float32),
    )


# ------------------------------- forward pass ---------------------------------

def attention_forward(params, Q, K, mask):
    # Layouts match nn.MultiheadAttention: Q (L, N, E), K (S, N, E),
    # mask (N, S) with True = padded key position.
    L, N, E = Q.shape
    S = K.shape[0]
    H = params["nhead"]
    d = E // H
    scale = 1.0 / math.sqrt(d)
    if N > 1 and E % 128 != 0:
        raise ValueError("(seq, N*E) lane-sliced layout needs E % 128 == 0 when N > 1")

    Wq, Wk, Wv = jnp.split(params["in_proj_w"], 3, axis=0)
    bq, bk, bv = jnp.split(params["in_proj_b"], 3, axis=0)

    # One-time parameter transforms (outside the kernels):
    #   * 1/sqrt(d) folded into the Q projection,
    #   * Wk/Wv fused into a single (E, 2E) projection,
    #   * matmul operands cast to MATMUL_DTYPE once (halves weight DMA).
    WqT = (Wq.T * scale).astype(MATMUL_DTYPE)
    bq_s = (bq * scale).reshape(1, E)
    WkvT = jnp.concatenate([Wk.T, Wv.T], axis=1).astype(MATMUL_DTYPE)
    bkv = jnp.concatenate([bk, bv]).reshape(1, 2 * E)
    WoT = params["out_proj_w"].T.astype(MATMUL_DTYPE)
    bo = params["out_proj_b"].reshape(1, E)
    W1T = params["lin1_w"].T.astype(MATMUL_DTYPE)
    b1 = params["lin1_b"].reshape(1, -1)
    W2T = params["lin2_w"].T.astype(MATMUL_DTYPE)
    b2 = params["lin2_b"].reshape(1, E)

    # Free, contiguous reshapes only — no XLA transposes of activations.
    Q2 = Q.reshape(L, N * E)
    K2 = K.reshape(S, N * E)
    mask3 = mask.astype(jnp.int32).reshape(N, 1, S)

    # Kernel 0: K/V projected once per batch (hoisted out of the query-tile grid).
    kv = _kv_projection(K2, WkvT, bkv, N=N, E=E)

    # Kernel 1: attention + out-proj + residual + LayerNorm1.
    src1, attn = _attention_block(Q2, kv, mask3, WqT, bq_s, WoT, bo,
                                  params["norm1_g"].reshape(1, E),
                                  params["norm1_b"].reshape(1, E),
                                  N=N, E=E, H=H)

    # TODO(synk): nn.Dropout layers are identity here (eval-mode semantics).
    # Kernel 2: FFN + residual + LayerNorm2 over all (l, n) rows.
    src = _ffn_block(src1.reshape(L * N, E), W1T, b1, W2T, b2,
                     params["norm2_g"].reshape(1, E),
                     params["norm2_b"].reshape(1, E))
    return src.reshape(L, N, E), attn


# ------------------------ pure-JAX reference (checks) --------------------------

def reference_forward(params, Q, K, mask, matmul_dtype=jnp.float32):
    dt = matmul_dtype

    def mm(a, b):
        return jnp.dot(a.astype(dt), b.astype(dt), preferred_element_type=jnp.float32)

    L, N, E = Q.shape
    S = K.shape[0]
    H = params["nhead"]
    d = E // H
    scale = 1.0 / math.sqrt(d)
    Wq, Wk, Wv = jnp.split(params["in_proj_w"], 3, axis=0)
    bq, bk, bv = jnp.split(params["in_proj_b"], 3, axis=0)

    q = (mm(Q.reshape(L * N, E), Wq.T * scale) + bq * scale
         ).reshape(L, N, H, d).transpose(1, 2, 0, 3)
    k = (mm(K.reshape(S * N, E), Wk.T) + bk).reshape(S, N, H, d).transpose(1, 2, 0, 3)
    v = (mm(K.reshape(S * N, E), Wv.T) + bv).reshape(S, N, H, d).transpose(1, 2, 0, 3)

    s = jnp.einsum("nhld,nhsd->nhls", q.astype(dt), k.astype(dt),
                   preferred_element_type=jnp.float32)
    s = s + jnp.where(mask, _MASK_NEG, 0.0)[:, None, None, :]
    p = jax.nn.softmax(s, axis=-1)
    attn = jnp.mean(p, axis=1)
    ctx = jnp.einsum("nhls,nhsd->nhld", p.astype(dt), v.astype(dt),
                     preferred_element_type=jnp.float32)
    ctx = ctx.transpose(2, 0, 1, 3).reshape(L * N, E)
    attn_out = mm(ctx, params["out_proj_w"].T) + params["out_proj_b"]

    def ln(z, g, b):
        mu = jnp.mean(z, axis=-1, keepdims=True)
        var = jnp.mean(jnp.square(z - mu), axis=-1, keepdims=True)
        return (z - mu) * jax.lax.rsqrt(var + _LN_EPS) * g + b

    src = ln(Q.reshape(L * N, E) + attn_out, params["norm1_g"], params["norm1_b"])
    h = jnp.maximum(mm(src, params["lin1_w"].T) + params["lin1_b"], 0.0)
    src2 = mm(h, params["lin2_w"].T) + params["lin2_b"]
    src = ln(src + src2, params["norm2_g"], params["norm2_b"])
    return src.reshape(L, N, E), attn


# ----------------------------------- main --------------------------------------

if __name__ == "__main__":
    # Small but kernel-friendly shapes: E is a lane multiple (128) so the
    # (seq, N*E) slab can be lane-sliced per batch; row tiles of 8/16 give
    # >= 2 grid steps on every "parallel" axis.
    L, S, N, E, H, FF = 16, 8, 2, 128, 4, 256

    key = jax.random.PRNGKey(0)
    kp, kq, kk = jax.random.split(key, 3)
    params = init_params(kp, E, H, FF)

    Q = jax.random.normal(kq, (L, N, E), jnp.float32)
    K = jax.random.normal(kk, (S, N, E), jnp.float32)
    # key_padding_mask: last two key positions of every batch are padding.
    mask = jnp.zeros((N, S), jnp.bool_).at[:, S - 2:].set(True)

    src, attn = attention_forward(params, Q, K, mask)
    jax.block_until_ready((src, attn))
    assert src.shape == (L, N, E) and attn.shape == (N, L, S)

    # Check 1: vs a pure-JAX reference using the SAME matmul dtype (tight).
    src_m, attn_m = reference_forward(params, Q, K, mask, matmul_dtype=MATMUL_DTYPE)
    assert jnp.allclose(src, src_m, atol=2e-3, rtol=2e-3)
    assert jnp.allclose(attn, attn_m, atol=2e-3, rtol=2e-3)

    # Check 2: vs the full-f32 reference (loose — bf16 matmul operands).
    src_f, attn_f = reference_forward(params, Q, K, mask, matmul_dtype=jnp.float32)
    assert jnp.allclose(src, src_f, atol=5e-2, rtol=5e-2)
    assert jnp.allclose(attn, attn_f, atol=1e-2, rtol=1e-2)

    print("KERNEL_OK")
</pallas_src>

<mosaic_0001>
module attributes {stable_mosaic.version = 11 : i64} {
  func.func @_kv_proj_kernel(%arg0: i32, %arg1: memref<8x128xf32, #tpu.memory_space<vmem>>, %arg2: memref<128x256xbf16, #tpu.memory_space<vmem>>, %arg3: memref<1x256xf32, #tpu.memory_space<vmem>>, %arg4: memref<1x8x256xbf16, #tpu.memory_space<vmem>>) attributes {dimension_semantics = [#tpu.dimension_semantics<parallel>], iteration_bounds = array<i64: 2>, scalar_prefetch = 0 : i64, scratch_operands = 0 : i64, tpu.core_type = #tpu.core_type<tc>, window_params = [{transform_indices = @transform_0, window_bounds = array<i64: 8, 128>}, {pipeline_mode = #tpu.pipeline_mode<synchronous>, transform_indices = @transform_1, window_bounds = array<i64: 128, 256>}, {pipeline_mode = #tpu.pipeline_mode<synchronous>, transform_indices = @transform_2, window_bounds = array<i64: 1, 256>}, {transform_indices = @transform_3, window_bounds = array<i64: 1, 8, 256>}]} {
    %c0 = arith.constant 0 : index
    %c0_0 = arith.constant 0 : index
    %0 = vector.load %arg1[%c0, %c0_0] : memref<8x128xf32, #tpu.memory_space<vmem>>, vector<8x128xf32>
    %1 = arith.truncf %0 : vector<8x128xf32> to vector<8x128xbf16>
    %c0_1 = arith.constant 0 : index
    %c0_2 = arith.constant 0 : index
    %2 = vector.load %arg2[%c0_1, %c0_2] : memref<128x256xbf16, #tpu.memory_space<vmem>>, vector<128x256xbf16>
    %cst = arith.constant dense<0.000000e+00> : vector<8x256xf32>
    %3 = tpu.matmul %1, %2, %cst {dimension_numbers = #tpu.dot_dimension_numbers<[1], [0], [0], [1], [0, 0, 1, 1], [], []>} : vector<8x128xbf16>, vector<128x256xbf16>, vector<8x256xf32> -> vector<8x256xf32>
    %c0_3 = arith.constant 0 : index
    %c0_4 = arith.constant 0 : index
    %4 = vector.load %arg3[%c0_3, %c0_4] : memref<1x256xf32, #tpu.memory_space<vmem>>, vector<1x256xf32>
    %5 = vector.broadcast %4 : vector<1x256xf32> to vector<8x256xf32>
    %6 = arith.addf %3, %5 : vector<8x256xf32>
    %7 = arith.truncf %6 : vector<8x256xf32> to vector<8x256xbf16>
    %c0_5 = arith.constant 0 : index
    %c0_6 = arith.constant 0 : index
    %c0_7 = arith.constant 0 : index
    %8 = vector.load %arg4[%c0_5, %c0_6, %c0_7] : memref<1x8x256xbf16, #tpu.memory_space<vmem>>, vector<1x8x256xbf16>
    %9 = vector.shape_cast %8 : vector<1x8x256xbf16> to vector<8x256xbf16>
    %10 = vector.shape_cast %7 : vector<8x256xbf16> to vector<1x8x256xbf16>
    tpu.vector_store %arg4[%c0_5, %c0_6, %c0_7], %10 {strides = array<i32>} : memref<1x8x256xbf16, #tpu.memory_space<vmem>>, vector<1x8x256xbf16>,
    return
  }
  func.func @transform_0(%arg0: i32) -> (i32, i32) {
    %c0_i32 = arith.constant 0 : i32
    %c0_i32_0 = arith.constant 0 : i32
    return %c0_i32, %arg0 : i32, i32
  }
  func.func @transform_1(%arg0: i32) -> (i32, i32) {
    %c0_i32 = arith.constant 0 : i32
    %c0_i32_0 = arith.constant 0 : i32
    %c0_i32_1 = arith.constant 0 : i32
    return %c0_i32, %c0_i32_0 : i32, i32
  }
  func.func @transform_2(%arg0: i32) -> (i32, i32) {
    %c0_i32 = arith.constant 0 : i32
    %c0_i32_0 = arith.constant 0 : i32
    %c0_i32_1 = arith.constant 0 : i32
    return %c0_i32, %c0_i32_0 : i32, i32
  }
  func.func @transform_3(%arg0: i32) -> (i32, i32, i32) {
    %c0_i32 = arith.constant 0 : i32
    %c0_i32_0 = arith.constant 0 : i32
    %c0_i32_1 = arith.constant 0 : i32
    return %arg0, %c0_i32, %c0_i32_0 : i32, i32, i32
  }
}

</mosaic_0001>

<llo_original>
// kernel: tpu_custom_call.1
$region0: #{tpu_custom_call.1}
  #allocation0 [shape = 'u32[]', space=smem, size = 0x4, offset = 0x4, fixed_abs, tag = 'smem constant byte address 0x4 - core index']
  #allocation1 [shape = 'u32[144,128]{1,0:T(1,128)}', space=vmem, size = 0x12000, scoped, tag = 'internal scratch']
  %s0 = inlined_call_operand.hbm [shape: f32[8,256], index: 0, kind: input, shape index: {}]
  %s1 = inlined_call_operand.hbm [shape: bf16[128,256], index: 1, kind: input, shape index: {}]
  %s2 = inlined_call_operand.vmem [shape: f32[1,256], index: 2, kind: input, shape index: {}]
  %s3 = inlined_call_operand.hbm [shape: bf16[2,8,256], index: 3, kind: output, shape index: {}]
  %s4 = sld [smem:[#allocation0]]
  $region53: #{tpu_custom_call.1} parent=0
    _
  %s6 = ssub.s32 1, %s4
  %s7 = scalar_select 0, %s6, %s4
  $region1: #{tpu_custom_call.1} parent=0
    #allocation2 [shape = 'u8[8192]{0}', space=vmem, size = 0x2000, scoped, tag = 'input window, operand 0']
    #allocation3 [shape = 's32[2]{0}', space=sflag, size = 0x8, scoped, tag = 'scoped memory for tpu_custom_call.1']
    #allocation4 [shape = 's32[2]{0}', space=sflag, size = 0x8, scoped, tag = 'scoped memory for tpu_custom_call.1']
    #allocation5 [shape = 'u8[65536]{0}', space=vmem, size = 0x10000, scoped, tag = 'input window, operand 1, single buffered']
    #allocation6 [shape = 's32[1]{0}', space=sflag, size = 0x4, scoped, tag = 'scoped memory for tpu_custom_call.1']
    #allocation7 [shape = 'u8[8192]{0}', space=vmem, size = 0x2000, scoped, tag = 'output window, operand 0']
    %8 = vsyncpa [#allocation3], 0
    %s9 = scalar_lea.sflag [#allocation3], 1
    %10 = vsyncpa %s9, 0
    %11 = vsyncpa [#allocation6], 0
    %12 = vsyncpa [#allocation4], 0
    %s13 = scalar_lea.sflag [#allocation4], 1
    %14 = vsyncpa %s13, 0
    loop: start=0, step=1, limit=4
    $region2: #{tpu_custom_call.1} parent=1 // loop_pre_header
      _
    $region3: #{tpu_custom_call.1} parent=1 // loop_header
      %s16 = sphi 0, %s20
      %p17 = scmp.ge.s32.totalorder %s16, 4
      %s26 = sphi 0, %s28
      %s29 = sphi 0, %s26
      %s30 = sphi 0, %s29
      %s46 = sphi 0, %s30
      %s50 = sphi 0, %s50
      %s52 = sphi 0, %s50
      %s53 = sphi 0, %s52
      %s67 = sphi 0, %s53
      %s71 = sphi 0, %s71
      %s73 = sphi 0, %s71
      %s74 = sphi 0, %s73
      %s88 = sphi 0, %s74
      %s94 = sphi 0, %s96
      %s97 = sphi 0, %s94
      %s98 = sphi 0, %s97
      %s114 = sphi 0, %s98
    $region4: #{tpu_custom_call.1} parent=1 // loop_header_branch
      %19 = sbr.rel (%p17) target = $region8
    $region5: #{tpu_custom_call.1} parent=1 // loop_body
      %s21 = ssub.s32 %s16, 1
      %s22 = ssub.s32 %s16, 2
      %s23 = sadd.s32 %s16, 1
      %s24 = ssub.s32 %s16, %s23
      %p25 = scmp.eq.s32.totalorder %s24, 0
      %s27 = sadd.s32 %s26, 1
      %s28 = scalar_select %p25, %s26, %s27
      %p31 = pneg %p25
      %p32 = scmp.eq.s32.totalorder %s16, 1
      %p33 = por %p31, %p32
      %p34 = scmp.ne.s32.totalorder %s26, %s29
      %p35 = scmp.eq.s32.totalorder %s16, 0
      %p36 = por %p34, %p35
      %p37 = scmp.ne.s32.totalorder %s26, %s29
      %p38 = scmp.eq.s32.totalorder %s21, 1
      %p39 = por %p37, %p38
      %p40 = scmp.ne.s32.totalorder %s29, %s30
      %p41 = scmp.eq.s32.totalorder %s21, 0
      %p42 = por %p40, %p41
      %p43 = scmp.ne.s32.totalorder %s29, %s30
      %p44 = scmp.eq.s32.totalorder %s22, 1
      %p45 = por %p43, %p44
      %p47 = scmp.ne.s32.totalorder %s30, %s46
      %p48 = scmp.eq.s32.totalorder %s22, 0
      %p49 = por %p47, %p48
      %s51 = sadd.s32 %s50, 1
      %p54 = scmp.eq.s32.totalorder %s16, 1
      %p55 = scmp.ne.s32.totalorder %s50, %s52
      %p56 = scmp.eq.s32.totalorder %s16, 0
      %p57 = por %p55, %p56
      %p58 = scmp.ne.s32.totalorder %s50, %s52
      %p59 = scmp.eq.s32.totalorder %s21, 1
      %p60 = por %p58, %p59
      %p61 = scmp.ne.s32.totalorder %s52, %s53
      %p62 = scmp.eq.s32.totalorder %s21, 0
      %p63 = por %p61, %p62
      %p64 = scmp.ne.s32.totalorder %s52, %s53
      %p65 = scmp.eq.s32.totalorder %s22, 1
      %p66 = por %p64, %p65
      %p68 = scmp.ne.s32.totalorder %s53, %s67
      %p69 = scmp.eq.s32.totalorder %s22, 0
      %p70 = por %p68, %p69
      %s72 = sadd.s32 %s71, 1
      %p75 = scmp.eq.s32.totalorder %s16, 1
      %p76 = scmp.ne.s32.totalorder %s71, %s73
      %p77 = scmp.eq.s32.totalorder %s16, 0
      %p78 = por %p76, %p77
      %p79 = scmp.ne.s32.totalorder %s71, %s73
      %p80 = scmp.eq.s32.totalorder %s21, 1
      %p81 = por %p79, %p80
      %p82 = scmp.ne.s32.totalorder %s73, %s74
      %p83 = scmp.eq.s32.totalorder %s21, 0
      %p84 = por %p82, %p83
      %p85 = scmp.ne.s32.totalorder %s73, %s74
      %p86 = scmp.eq.s32.totalorder %s22, 1
      %p87 = por %p85, %p86
      %p89 = scmp.ne.s32.totalorder %s74, %s88
      %p90 = scmp.eq.s32.totalorder %s22, 0
      %p91 = por %p89, %p90
      %s92 = ssub.s32 %s16, %s23
      %p93 = scmp.eq.s32.totalorder %s92, 0
      %s95 = sadd.s32 %s94, 1
      %s96 = scalar_select %p93, %s94, %s95
      %p99 = pneg %p93
      %p100 = scmp.eq.s32.totalorder %s16, 1
      %p101 = por %p99, %p100
      %p102 = scmp.ne.s32.totalorder %s94, %s97
      %p103 = scmp.eq.s32.totalorder %s16, 0
      %p104 = por %p102, %p103
      %p105 = scmp.ne.s32.totalorder %s94, %s97
      %p106 = scmp.eq.s32.totalorder %s21, 1
      %p107 = por %p105, %p106
      %p108 = scmp.ne.s32.totalorder %s97, %s98
      %p109 = scmp.eq.s32.totalorder %s21, 0
      %p110 = por %p108, %p109
      %p111 = scmp.ne.s32.totalorder %s97, %s98
      %p112 = scmp.eq.s32.totalorder %s22, 1
      %p113 = por %p111, %p112
      %p115 = scmp.ne.s32.totalorder %s98, %s114
      %p116 = scmp.eq.s32.totalorder %s22, 0
      %p117 = por %p115, %p116
      %p118 = scmp.le.s32.totalorder 1, %s16
      %p119 = scmp.lt.s32.totalorder %s16, 3
      %p120 = pnand %p118, %p119
      %p121 = pneg %p120
      // Predicated region
      $region9: #{tpu_custom_call.1} parent=5 // pred_check
        _
      $region10: #{tpu_custom_call.1} parent=5 // pred_check_branch
        %123 = sbr.rel (%p120) target = $region12
      $region11: #{tpu_custom_call.1} parent=5 // pred_region
        %s124 = ssub.s32 %s16, 1
        // Predicated region
        $region13: #{tpu_custom_call.1} parent=11 // pred_check
          %p125 = pneg %p63
        $region14: #{tpu_custom_call.1} parent=11 // pred_check_branch
          %127 = sbr.rel (%p125) target = $region16
        $region15: #{tpu_custom_call.1} parent=11 // pred_region
          %s129 = ssub.s32 2048, 2048
          %130 = vsyncadd [#allocation6], %s129
          %s131 = sshll.u32 [#allocation5], 4
          %s132 = int_to_ptr.vmem [resolvable:$true] %s131
          %137 = dma.hbm_to_vmem [thread:$0]  %s1, 2048, %s132, [#allocation6], 128, 128, 8
        $region16: #{tpu_custom_call.1} parent=11 // pred_fallthru
          _
        // Predicated region
        $region17: #{tpu_custom_call.1} parent=11 // pred_check
          %p138 = pneg %p84
        $region18: #{tpu_custom_call.1} parent=11 // pred_check_branch
          %140 = sbr.rel (%p138) target = $region20
        $region19: #{tpu_custom_call.1} parent=11 // pred_region
          _
        $region20: #{tpu_custom_call.1} parent=11 // pred_fallthru
          _
      $region12: #{tpu_custom_call.1} parent=5 // pred_fallthru
        _
      %p141 = scmp.lt.s32.totalorder %s16, 2
      // Predicated region
      $region21: #{tpu_custom_call.1} parent=5 // pred_check
        %p142 = pneg %p141
      $region22: #{tpu_custom_call.1} parent=5 // pred_check_branch
        %144 = sbr.rel (%p142) target = $region24
      $region23: #{tpu_custom_call.1} parent=5 // pred_region
        // Predicated region
        $region25: #{tpu_custom_call.1} parent=23 // pred_check
          %p145 = pneg %p36
        $region26: #{tpu_custom_call.1} parent=23 // pred_check_branch
          %147 = sbr.rel (%p145) target = $region28
        $region27: #{tpu_custom_call.1} parent=23 // pred_region
          %s148 = sand.u32 %s26, 1
          %s149 = scalar_lea.sflag [#allocation3], %s148
          %s150 = sand.u32 %s26, 1
          %s151 = smul.addr %s150, 8
          %s152 = scalar_lea.vmem [#allocation2], %s151
          %s154 = ssub.s32 128, 128
          %155 = vsyncadd %s149, %s154
          %s156 = smul.addr %s16, 128
          %s157 = scalar_lea.hbm %s0, %s156
          %s159 = sshll.u32 %s152, 4
          %s160 = int_to_ptr.vmem [resolvable:$true] %s159
          %162 = dma.hbm_to_vmem [thread:$0]  %s157, 128, %s160, %s149
        $region28: #{tpu_custom_call.1} parent=23 // pred_fallthru
          _
      $region24: #{tpu_custom_call.1} parent=5 // pred_fallthru
        _
      %p163 = scmp.le.s32.totalorder 1, %s16
      %p164 = scmp.lt.s32.totalorder %s16, 3
      %p165 = pnand %p163, %p164
      %p166 = pneg %p165
      // Predicated region
      $region29: #{tpu_custom_call.1} parent=5 // pred_check
        _
      $region30: #{tpu_custom_call.1} parent=5 // pred_check_branch
        %168 = sbr.rel (%p165) target = $region32
      $region31: #{tpu_custom_call.1} parent=5 // pred_region
        %s169 = ssub.s32 %s16, 1
        %s170 = sand.u32 %s29, 1
        %s171 = scalar_lea.sflag [#allocation3], %s170
        %s172 = sand.u32 %s29, 1
        %s173 = smul.addr %s172, 8
        %s174 = scalar_lea.vmem [#allocation2], %s173
        // Predicated region
        $region33: #{tpu_custom_call.1} parent=31 // pred_check
          %p175 = pneg %p42
        $region34: #{tpu_custom_call.1} parent=31 // pred_check_branch
          %177 = sbr.rel (%p175) target = $region36
        $region35: #{tpu_custom_call.1} parent=31 // pred_region
          %178 = dma.done %s171, 128
        $region36: #{tpu_custom_call.1} parent=31 // pred_fallthru
          _
        // Predicated region
        $region37: #{tpu_custom_call.1} parent=31 // pred_check
          %p179 = pneg %p63
        $region38: #{tpu_custom_call.1} parent=31 // pred_check_branch
          %181 = sbr.rel (%p179) target = $region40
        $region39: #{tpu_custom_call.1} parent=31 // pred_region
          %182 = dma.done [#allocation6], 2048
        $region40: #{tpu_custom_call.1} parent=31 // pred_fallthru
          _
        %s183 = sand.u32 %s29, 1
        %s184 = scalar_lea.sflag [#allocation3], %s183
        %s185 = sand.u32 %s29, 1
        %s186 = smul.addr %s185, 8
        %s187 = scalar_lea.vmem [#allocation2], %s186
        %p188 = pneg %p42
        %p189 = pneg %p39
        %p190 = pneg %p63
        %p191 = pneg %p60
        %p192 = pneg %p84
        %p193 = pneg %p81
        %p194 = pneg %p110
        %p195 = pneg %p107
        %s196 = sand.u32 %s97, 1
        %s197 = scalar_lea.sflag [#allocation4], %s196
        %s198 = sand.u32 %s97, 1
        %s199 = smul.addr %s198, 8
        %s200 = scalar_lea.vmem [#allocation7], %s199
        %v202 = vld [vmem:[%s174] sm:$0xff]
        %v203 = vpack.c.bf16 %v202, %v202
        %v204 = vld [vmem:[#allocation5] sm:$0xff]
        %v205 = vld [vmem:[#allocation5 + $0x8] sm:$0xff]
        %v206 = vld [vmem:[#allocation5 + $0x10] sm:$0xff]
        %v207 = vld [vmem:[#allocation5 + $0x18] sm:$0xff]
        %v208 = vld [vmem:[#allocation5 + $0x20] sm:$0xff]
        %v209 = vld [vmem:[#allocation5 + $0x28] sm:$0xff]
        %v210 = vld [vmem:[#allocation5 + $0x30] sm:$0xff]
        %v211 = vld [vmem:[#allocation5 + $0x38] sm:$0xff]
        %v212 = vld [vmem:[#allocation5 + $0x40] sm:$0xff]
        %v213 = vld [vmem:[#allocation5 + $0x48] sm:$0xff]
        %v214 = vld [vmem:[#allocation5 + $0x50] sm:$0xff]
        %v215 = vld [vmem:[#allocation5 + $0x58] sm:$0xff]
        %v216 = vld [vmem:[#allocation5 + $0x60] sm:$0xff]
        %v217 = vld [vmem:[#allocation5 + $0x68] sm:$0xff]
        %v218 = vld [vmem:[#allocation5 + $0x70] sm:$0xff]
        %v219 = vld [vmem:[#allocation5 + $0x78] sm:$0xff]
        %v220 = vld [vmem:[%s2] sm:$0x3]
        %v222 = vlaneseq
        %v223 = vshrl.u32 %v222, 7
        %v224 = vsub.s32 0, %v223
        %v225 = vrot.slane %v220, %v224
        %v226 = vlaneseq
        %v227 = vshrl.u32 %v226, 7
        %v228 = vsub.s32 1, %v227
        %v229 = vrot.slane %v220, %v228
        %v248 = vunpack.c.l.b16 %v204
        %v249 = vunpack.c.h.b16 %v204
        %v250 = vunpack.c.l.b16 %v205
        %v251 = vunpack.c.h.b16 %v205
        %v252 = vunpack.c.l.b16 %v206
        %v253 = vunpack.c.h.b16 %v206
        %v254 = vunpack.c.l.b16 %v207
        %v255 = vunpack.c.h.b16 %v207
        %v256 = vunpack.c.l.b16 %v208
        %v257 = vunpack.c.h.b16 %v208
        %v258 = vunpack.c.l.b16 %v209
        %v259 = vunpack.c.h.b16 %v209
        %v260 = vunpack.c.l.b16 %v210
        %v261 = vunpack.c.h.b16 %v210
        %v262 = vunpack.c.l.b16 %v211
        %v263 = vunpack.c.h.b16 %v211
        %v264 = vunpack.c.l.b16 %v212
        %v265 = vunpack.c.h.b16 %v212
        %v266 = vunpack.c.l.b16 %v213
        %v267 = vunpack.c.h.b16 %v213
        %v268 = vunpack.c.l.b16 %v214
        %v269 = vunpack.c.h.b16 %v214
        %v270 = vunpack.c.l.b16 %v215
        %v271 = vunpack.c.h.b16 %v215
        %v272 = vunpack.c.l.b16 %v216
        %v273 = vunpack.c.h.b16 %v216
        %v274 = vunpack.c.l.b16 %v217
        %v275 = vunpack.c.h.b16 %v217
        %v276 = vunpack.c.l.b16 %v218
        %v277 = vunpack.c.h.b16 %v218
        %v278 = vunpack.c.l.b16 %v219
        %v279 = vunpack.c.h.b16 %v219
        %v280 = vpack.c.b16 %v250, %v248
        %v281 = vpack.c.b16 %v251, %v249
        %v282 = vpack.c.b16 %v254, %v252
        %v283 = vpack.c.b16 %v255, %v253
        %v284 = vpack.c.b16 %v258, %v256
        %v285 = vpack.c.b16 %v259, %v257
        %v286 = vpack.c.b16 %v262, %v260
        %v287 = vpack.c.b16 %v263, %v261
        %v288 = vpack.c.b16 %v266, %v264
        %v289 = vpack.c.b16 %v267, %v265
        %v290 = vpack.c.b16 %v270, %v268
        %v291 = vpack.c.b16 %v271, %v269
        %v292 = vpack.c.b16 %v274, %v272
        %v293 = vpack.c.b16 %v275, %v273
        %v294 = vpack.c.b16 %v278, %v276
        %v295 = vpack.c.b16 %v279, %v277
        %312 = vmatprep.subr.bf16.mxu0 %v281
        %313 = vmatpush1.bf16.msra.mxu0 %v280
        %314 = vmatprep.subr.bf16.mxu0 %v283
        %315 = vmatpush1.bf16.msra.mxu0 %v282
        %316 = vmatprep.subr.bf16.mxu0 %v285
        %317 = vmatpush1.bf16.msra.mxu0 %v284
        %318 = vmatprep.subr.bf16.mxu0 %v287
        %319 = vmatpush1.bf16.msra.mxu0 %v286
        %320 = vmatprep.subr.bf16.mxu0 %v289
        %321 = vmatpush1.bf16.msra.mxu0 %v288
        %322 = vmatprep.subr.bf16.mxu0 %v291
        %323 = vmatpush1.bf16.msra.mxu0 %v290
        %324 = vmatprep.subr.bf16.mxu0 %v293
        %325 = vmatpush1.bf16.msra.mxu0 %v292
        %326 = vmatprep.subr.bf16.mxu0 %v295
        %327 = vmatpush1.bf16.msra.mxu0 %v294
        %328 = vmatprep.subr.bf16.mxu0 0
        %329 = vmatpush1.bf16.msra.mxu0 0
        %330 = vmatprep.subr.bf16.mxu0 0
        %331 = vmatpush1.bf16.msra.mxu0 0
        %332 = vmatprep.subr.bf16.mxu0 0
        %333 = vmatpush1.bf16.msra.mxu0 0
        %334 = vmatprep.subr.bf16.mxu0 0
        %335 = vmatpush1.bf16.msra.mxu0 0
        %336 = vmatprep.subr.bf16.mxu0 0
        %337 = vmatpush1.bf16.msra.mxu0 0
        %338 = vmatprep.subr.bf16.mxu0 0
        %339 = vmatpush1.bf16.msra.mxu0 0
        %340 = vmatprep.subr.bf16.mxu0 0
        %341 = vmatpush1.bf16.msra.mxu0 0
        %342 = vmatprep.subr.bf16.mxu0 0
        %343 = vmatpush1.bf16.msra.mxu0 0
        %344 = vmatprep.mubr.bf16.mxu0 0
        %345 = vmatmul.mubr.bf16.gmra.mrb[0].mxu0 %v203
        %v346 = vpop.f32.mrb[0].mxu0
        %v347 = vadd.f32 %v225, %v346
        %v348 = vpop.f32.mrb[0].mxu0
        %v349 = vadd.f32 %v229, %v348
        %v350 = vpop.f32.mrb[0].mxu0
        %v351 = vpop.f32.mrb[0].mxu0
        %352 = vdwg.mxu0
        %v353 = vpack.c.bf16 %v347, %v347
        %v354 = vpack.c.bf16 %v349, %v349
        %v357 = vunpack.c.l.b16 %v353
        %v358 = vunpack.c.l.b16 %v354
        %v359 = vpack.c.b16 %v358, %v357
        %361 = vst [vmem:[%s200] sm:$0xff] %v359
        %s362 = sand.u32 %s97, 1
        %s363 = scalar_lea.sflag [#allocation4], %s362
        %s364 = sand.u32 %s97, 1
        %s365 = smul.addr %s364, 8
        %s366 = scalar_lea.vmem [#allocation7], %s365
        // Predicated region
        $region41: #{tpu_custom_call.1} parent=31 // pred_check
          %p367 = pneg %p107
        $region42: #{tpu_custom_call.1} parent=31 // pred_check_branch
          %369 = sbr.rel (%p367) target = $region44
        $region43: #{tpu_custom_call.1} parent=31 // pred_region
          %s371 = ssub.s32 128, 128
          %372 = vsyncadd %s363, %s371
          %s373 = smul.addr %s21, 2
          %s374 = smul.addr %s373, 64
          %s375 = scalar_lea.hbm %s3, %s374
          %s377 = sshll.u32 %s366, 4
          %s378 = int_to_ptr.vmem [resolvable:$true] %s377
          %380 = dma.vmem_to_hbm [thread:$0]  %s378, 128, %s375, %s363
        $region44: #{tpu_custom_call.1} parent=31 // pred_fallthru
          _
      $region32: #{tpu_custom_call.1} parent=5 // pred_fallthru
        _
      %p381 = scmp.le.s32.totalorder 2, %s16
      // Predicated region
      $region45: #{tpu_custom_call.1} parent=5 // pred_check
        %p382 = pneg %p381
      $region46: #{tpu_custom_call.1} parent=5 // pred_check_branch
        %384 = sbr.rel (%p382) target = $region48
      $region47: #{tpu_custom_call.1} parent=5 // pred_region
        %s385 = ssub.s32 %s16, 2
        // Predicated region
        $region49: #{tpu_custom_call.1} parent=47 // pred_check
          %p386 = pneg %p113
        $region50: #{tpu_custom_call.1} parent=47 // pred_check_branch
          %388 = sbr.rel (%p386) target = $region52
        $region51: #{tpu_custom_call.1} parent=47 // pred_region
          %s389 = sand.u32 %s98, 1
          %s390 = scalar_lea.sflag [#allocation4], %s389
          %s391 = sand.u32 %s98, 1
          %s392 = smul.addr %s391, 8
          %s393 = scalar_lea.vmem [#allocation7], %s392
          %394 = dma.done %s390, 128
        $region52: #{tpu_custom_call.1} parent=47 // pred_fallthru
          _
      $region48: #{tpu_custom_call.1} parent=5 // pred_fallthru
        _
    $region6: #{tpu_custom_call.1} parent=1 // loop_footer
      %s20 = sadd.s32 1, %s16
    $region7: #{tpu_custom_call.1} parent=1 // loop_footer_branch
      %15 = sbr.rel target = $region3
    $region8: #{tpu_custom_call.1} parent=1 // loop_exit
      _
    %395 = vsyncpa [#allocation3], 1
    %s396 = scalar_lea.sflag [#allocation3], 1
    %397 = vsyncpa %s396, 1
    %398 = vsyncpa [#allocation6], 1
    %399 = vsyncpa [#allocation4], 1
    %s400 = scalar_lea.sflag [#allocation4], 1
    %401 = vsyncpa %s400, 1

</llo_original>
